<compile_context>
chip_gen: v5e
topology: v5e:2x2
jax: 0.10.0
libtpu: 0.0.40
codegen_flags: <defaults>
</compile_context>

<pallas_src>
from functools import partial

import jax
import jax.numpy as jnp
from jax.experimental import pallas as pl
from jax.experimental.pallas import tpu as pltpu


def _head_kernel(x_ref, w1_ref, b1_ref, w2_ref, b2_ref, o_ref):
    """One token tile: o = tanh(x @ W1 + b1) @ W2 + b2 with f32 accumulation."""
    x = x_ref[...]                                          # [TN, H], native dtype
    # First matmul on the MXU, f32 accumulation, no operand up-cast.
    h = jnp.dot(x, w1_ref[...], preferred_element_type=jnp.float32)
    # Bias + tanh in f32 (VPU + EUP — hidden under the MXU work).
    h = jnp.tanh(h + b1_ref[...].astype(jnp.float32))
    # tanh output is bounded in [-1, 1] -> safe to feed the second matmul in
    # the weight dtype (bf16 weights hit the bf16 MXU path directly).
    h = h.astype(w2_ref.dtype)
    out = jnp.dot(h, w2_ref[...], preferred_element_type=jnp.float32)
    out = out + b2_ref[...].astype(jnp.float32)
    o_ref[...] = out.astype(o_ref.dtype)                    # lane-dense [TN, Lp] store


def _vmem_capacity_bytes():
    try:
        return int(pltpu.get_tpu_info().vmem_capacity_bytes)
    except Exception:
        return 64 << 20          # conservative fallback (v7x per-core VMEM)


def pad_out_proj(w2, b2):
    """Pad out_proj weights to a lane-dense label count.

    Call once at weight-load time (weights are static across calls), NOT per
    forward call.
    """
    H, L = w2.shape
    Lp = max(128, ((L + 127) // 128) * 128)
    if Lp == L:
        return w2, b2
    w2p = jnp.zeros((H, Lp), w2.dtype).at[:, :L].set(w2)
    b2p = jnp.zeros((Lp,), b2.dtype).at[:L].set(b2)
    return w2p, b2p


@partial(jax.jit, static_argnames=("num_labels",))
def model_head_forward(features, w1, b1, w2p, b2p, *, num_labels):
    """features: [B, S, H] -> f32 logits [B, S, num_labels].

    w2p/b2p must already be padded with `pad_out_proj` (done once, not per call).
    """
    B, S, H = features.shape
    Lp = w2p.shape[1]
    L = num_labels
    N = B * S
    x2d = features.reshape(N, H)                    # metadata-only reshape

    xb = jnp.dtype(features.dtype).itemsize
    wb = jnp.dtype(w1.dtype).itemsize

    # ---- token-dim tiling; budget derived from the real chip's VMEM ---------
    vmem_budget = int(0.85 * _vmem_capacity_bytes())        # leave Mosaic headroom

    weight_bytes = (H * H + H * Lp + H + Lp) * wb           # single-buffered, resident

    def _need(tn_):
        return (weight_bytes
                + 2 * tn_ * H * xb          # x tile, double buffered
                + 2 * tn_ * Lp * 4          # f32 out tile, double buffered
                + 2 * tn_ * H * 4)          # f32 matmul/tanh intermediate headroom

    tn = 2048 if xb <= 2 else 1024
    while tn > 8 and _need(tn) > vmem_budget:
        tn //= 2
    TN = N if N <= tn else tn               # full extent, or a multiple of 8
    grid = (pl.cdiv(N, TN),)                # partial last tile is masked by Pallas

    vmem_limit = int(min(max(2 * _need(TN), 32 << 20), vmem_budget))

    cost = pl.CostEstimate(
        flops=2 * N * H * (H + Lp),
        transcendentals=N * H,
        bytes_accessed=N * H * xb + (H * H + H * Lp) * wb + N * Lp * 4,
    )

    resident = dict(pipeline_mode=pl.Buffered(buffer_count=1))   # grid-invariant

    out = pl.pallas_call(
        _head_kernel,
        out_shape=jax.ShapeDtypeStruct((N, Lp), jnp.float32),
        grid_spec=pltpu.PrefetchScalarGridSpec(
            num_scalar_prefetch=0,
            grid=grid,
            in_specs=[
                pl.BlockSpec((TN, H), lambda i: (i, 0)),               # streamed x tile
                pl.BlockSpec((H, H), lambda i: (0, 0), **resident),    # W1 (resident)
                pl.BlockSpec((1, H), lambda i: (0, 0), **resident),    # b1
                pl.BlockSpec((H, Lp), lambda i: (0, 0), **resident),   # W2 (padded)
                pl.BlockSpec((1, Lp), lambda i: (0, 0), **resident),   # b2 (padded)
            ],
            out_specs=pl.BlockSpec((TN, Lp), lambda i: (i, 0)),
        ),
        compiler_params=pltpu.CompilerParams(
            dimension_semantics=("parallel",),      # shard token tiles across TCs
            vmem_limit_bytes=vmem_limit,
        ),
        cost_estimate=cost,
    )(x2d, w1, b1.reshape(1, H), w2p, b2p.reshape(1, Lp))

    return out[:, :L].reshape(B, S, L)


def init_params(key, hidden_size, num_labels, dtype=jnp.float32):
    """Deterministic PyTorch-style (uniform +/- 1/sqrt(fan_in)) init."""
    k1, k2, k3, k4 = jax.random.split(key, 4)
    bound = 1.0 / jnp.sqrt(hidden_size)
    # weights stored already transposed: y = x @ W + b
    w1 = jax.random.uniform(k1, (hidden_size, hidden_size), dtype, -bound, bound)
    b1 = jax.random.uniform(k2, (hidden_size,), dtype, -bound, bound)
    w2 = jax.random.uniform(k3, (hidden_size, num_labels), dtype, -bound, bound)
    b2 = jax.random.uniform(k4, (num_labels,), dtype, -bound, bound)
    return w1, b1, w2, b2


if __name__ == "__main__":
    # small shapes consistent with the module: batch=2, seq=8, hidden=32, labels=4
    B, S, H, L = 2, 8, 32, 4
    key = jax.random.PRNGKey(0)
    k_feat, k_params = jax.random.split(key)

    features = jax.random.normal(k_feat, (B, S, H), jnp.float32)
    w1, b1, w2, b2 = init_params(k_params, H, L)

    # reference in plain JAX (dropout = identity in eval mode)
    ref = jnp.tanh(features @ w1 + b1) @ w2 + b2

    # ---- f32 path: tight tolerance ------------------------------------------
    w2p, b2p = pad_out_proj(w2, b2)                  # pad once at weight-load time
    out = model_head_forward(features, w1, b1, w2p, b2p, num_labels=L)
    out = jax.block_until_ready(out)
    assert out.shape == (B, S, L)
    assert out.dtype == jnp.float32
    assert jnp.allclose(out, ref, atol=1e-5, rtol=1e-5)

    # ---- bf16 fast path (bf16 MXU operands, f32 accumulation / logits) ------
    bf16 = jnp.bfloat16
    w2p_bf, b2p_bf = pad_out_proj(w2.astype(bf16), b2.astype(bf16))
    out_bf = model_head_forward(features.astype(bf16), w1.astype(bf16),
                                b1.astype(bf16), w2p_bf, b2p_bf, num_labels=L)
    out_bf = jax.block_until_ready(out_bf)
    assert out_bf.shape == (B, S, L)
    assert out_bf.dtype == jnp.float32
    assert jnp.allclose(out_bf, ref, atol=1e-1, rtol=1e-1)

    print("KERNEL_OK")
</pallas_src>

<mosaic_0001>
module attributes {stable_mosaic.version = 11 : i64} {
  func.func @_head_kernel(%arg0: i32, %arg1: memref<16x32xf32, #tpu.memory_space<vmem>>, %arg2: memref<32x32xf32, #tpu.memory_space<vmem>>, %arg3: memref<1x32xf32, #tpu.memory_space<vmem>>, %arg4: memref<32x128xf32, #tpu.memory_space<vmem>>, %arg5: memref<1x128xf32, #tpu.memory_space<vmem>>, %arg6: memref<16x128xf32, #tpu.memory_space<vmem>>) attributes {dimension_semantics = [#tpu.dimension_semantics<parallel>], iteration_bounds = array<i64: 1>, scalar_prefetch = 0 : i64, scratch_operands = 0 : i64, tpu.core_type = #tpu.core_type<tc>, window_params = [{transform_indices = @transform_0, window_bounds = array<i64: 16, 32>}, {pipeline_mode = #tpu.pipeline_mode<synchronous>, transform_indices = @transform_1, window_bounds = array<i64: 32, 32>}, {pipeline_mode = #tpu.pipeline_mode<synchronous>, transform_indices = @transform_2, window_bounds = array<i64: 1, 32>}, {pipeline_mode = #tpu.pipeline_mode<synchronous>, transform_indices = @transform_3, window_bounds = array<i64: 32, 128>}, {pipeline_mode = #tpu.pipeline_mode<synchronous>, transform_indices = @transform_4, window_bounds = array<i64: 1, 128>}, {transform_indices = @transform_5, window_bounds = array<i64: 16, 128>}]} {
    %c0 = arith.constant 0 : index
    %c0_0 = arith.constant 0 : index
    %0 = vector.load %arg1[%c0, %c0_0] : memref<16x32xf32, #tpu.memory_space<vmem>>, vector<16x32xf32>
    %c0_1 = arith.constant 0 : index
    %c0_2 = arith.constant 0 : index
    %1 = vector.load %arg2[%c0_1, %c0_2] : memref<32x32xf32, #tpu.memory_space<vmem>>, vector<32x32xf32>
    %cst = arith.constant dense<0.000000e+00> : vector<16x32xf32>
    %2 = tpu.matmul %0, %1, %cst {dimension_numbers = #tpu.dot_dimension_numbers<[1], [0], [0], [1], [0, 0, 1, 1], [], []>} : vector<16x32xf32>, vector<32x32xf32>, vector<16x32xf32> -> vector<16x32xf32>
    %c0_3 = arith.constant 0 : index
    %c0_4 = arith.constant 0 : index
    %3 = vector.load %arg3[%c0_3, %c0_4] : memref<1x32xf32, #tpu.memory_space<vmem>>, vector<1x32xf32>
    %4 = vector.broadcast %3 : vector<1x32xf32> to vector<16x32xf32>
    %5 = arith.addf %2, %4 : vector<16x32xf32>
    %6 = math.tanh %5 : vector<16x32xf32>
    %c0_5 = arith.constant 0 : index
    %c0_6 = arith.constant 0 : index
    %7 = vector.load %arg4[%c0_5, %c0_6] : memref<32x128xf32, #tpu.memory_space<vmem>>, vector<32x128xf32>
    %cst_7 = arith.constant dense<0.000000e+00> : vector<16x128xf32>
    %8 = tpu.matmul %6, %7, %cst_7 {dimension_numbers = #tpu.dot_dimension_numbers<[1], [0], [0], [1], [0, 0, 1, 1], [], []>} : vector<16x32xf32>, vector<32x128xf32>, vector<16x128xf32> -> vector<16x128xf32>
    %c0_8 = arith.constant 0 : index
    %c0_9 = arith.constant 0 : index
    %9 = vector.load %arg5[%c0_8, %c0_9] : memref<1x128xf32, #tpu.memory_space<vmem>>, vector<1x128xf32>
    %10 = vector.broadcast %9 : vector<1x128xf32> to vector<16x128xf32>
    %11 = arith.addf %8, %10 : vector<16x128xf32>
    %c0_10 = arith.constant 0 : index
    %c0_11 = arith.constant 0 : index
    %12 = vector.load %arg6[%c0_10, %c0_11] : memref<16x128xf32, #tpu.memory_space<vmem>>, vector<16x128xf32>
    tpu.vector_store %arg6[%c0_10, %c0_11], %11 {strides = array<i32>} : memref<16x128xf32, #tpu.memory_space<vmem>>, vector<16x128xf32>,
    return
  }
  func.func @transform_0(%arg0: i32) -> (i32, i32) {
    %c0_i32 = arith.constant 0 : i32
    %c0_i32_0 = arith.constant 0 : i32
    return %arg0, %c0_i32 : i32, i32
  }
  func.func @transform_1(%arg0: i32) -> (i32, i32) {
    %c0_i32 = arith.constant 0 : i32
    %c0_i32_0 = arith.constant 0 : i32
    %c0_i32_1 = arith.constant 0 : i32
    return %c0_i32, %c0_i32_0 : i32, i32
  }
  func.func @transform_2(%arg0: i32) -> (i32, i32) {
    %c0_i32 = arith.constant 0 : i32
    %c0_i32_0 = arith.constant 0 : i32
    %c0_i32_1 = arith.constant 0 : i32
    return %c0_i32, %c0_i32_0 : i32, i32
  }
  func.func @transform_3(%arg0: i32) -> (i32, i32) {
    %c0_i32 = arith.constant 0 : i32
    %c0_i32_0 = arith.constant 0 : i32
    %c0_i32_1 = arith.constant 0 : i32
    return %c0_i32, %c0_i32_0 : i32, i32
  }
  func.func @transform_4(%arg0: i32) -> (i32, i32) {
    %c0_i32 = arith.constant 0 : i32
    %c0_i32_0 = arith.constant 0 : i32
    %c0_i32_1 = arith.constant 0 : i32
    return %c0_i32, %c0_i32_0 : i32, i32
  }
  func.func @transform_5(%arg0: i32) -> (i32, i32) {
    %c0_i32 = arith.constant 0 : i32
    %c0_i32_0 = arith.constant 0 : i32
    return %arg0, %c0_i32 : i32, i32
  }
}

</mosaic_0001>

<llo_original>
// kernel: model_head_forward.1
$region0: #{model_head_forward.1}
  #allocation0 [shape = 'u32[]', space=smem, size = 0x4, offset = 0x4, fixed_abs, tag = 'smem constant byte address 0x4 - core index']
  #allocation1 [shape = 'u32[72,128]{1,0:T(1,128)}', space=vmem, size = 0x9000, scoped, tag = 'internal scratch']
  %s0 = inlined_call_operand.hbm [shape: f32[16,32], index: 0, kind: input, shape index: {}]
  %s1 = inlined_call_operand.hbm [shape: f32[32,32], index: 1, kind: input, shape index: {}]
  %s2 = inlined_call_operand.vmem [shape: f32[1,32], index: 2, kind: input, shape index: {}]
  %s3 = inlined_call_operand.hbm [shape: f32[32,128], index: 3, kind: input, shape index: {}]
  %s4 = inlined_call_operand.vmem [shape: f32[1,128], index: 4, kind: input, shape index: {}]
  %s5 = inlined_call_operand.vmem [shape: f32[16,128], index: 5, kind: output, shape index: {}]
  %s6 = sld [smem:[#allocation0]]
  $region42: #{model_head_forward.1} parent=0
    _
  %s8 = ssub.s32 1, %s6
  %s9 = scalar_select 0, %s8, %s6
  $region1: #{model_head_forward.1} parent=0
    #allocation2 [shape = 'u8[8192]{0}', space=vmem, size = 0x2000, scoped, tag = 'input window, operand 0, single buffered']
    #allocation3 [shape = 's32[1]{0}', space=sflag, size = 0x4, scoped, tag = 'scoped memory for model_head_forward.1']
    #allocation4 [shape = 'u8[16384]{0}', space=vmem, size = 0x4000, scoped, tag = 'input window, operand 1, single buffered']
    #allocation5 [shape = 's32[1]{0}', space=sflag, size = 0x4, scoped, tag = 'scoped memory for model_head_forward.1']
    #allocation6 [shape = 'u8[16384]{0}', space=vmem, size = 0x4000, scoped, tag = 'input window, operand 3, single buffered']
    %10 = vsyncpa [#allocation3], 0
    %11 = vsyncpa [#allocation5], 0
    // Predicated region
    $region2: #{model_head_forward.1} parent=1 // pred_check
      _
    $region3: #{model_head_forward.1} parent=1 // pred_check_branch
      %13 = sbr.rel (0) target = $region5
    $region4: #{model_head_forward.1} parent=1 // pred_region
      %15 = vsyncadd [#allocation3], 0
      %s16 = sshll.u32 %s0, 4
      %s17 = int_to_ptr.hbm [resolvable:$true] %s16
      %s18 = sshll.u32 [#allocation2], 4
      %s19 = int_to_ptr.vmem [resolvable:$true] %s18
      %24 = dma.hbm_to_vmem [thread:$0]  %s17, 256, %s19, [#allocation3], 128, 128, 8
    $region5: #{model_head_forward.1} parent=1 // pred_fallthru
      _
    // Predicated region
    $region6: #{model_head_forward.1} parent=1 // pred_check
      _
    $region7: #{model_head_forward.1} parent=1 // pred_check_branch
      %26 = sbr.rel (0) target = $region9
    $region8: #{model_head_forward.1} parent=1 // pred_region
      %28 = vsyncadd [#allocation5], 0
      %s29 = sshll.u32 %s1, 4
      %s30 = int_to_ptr.hbm [resolvable:$true] %s29
      %s31 = sshll.u32 [#allocation4], 4
      %s32 = int_to_ptr.vmem [resolvable:$true] %s31
      %37 = dma.hbm_to_vmem [thread:$0]  %s30, 512, %s32, [#allocation5], 128, 128, 8
    $region9: #{model_head_forward.1} parent=1 // pred_fallthru
      _
    // Predicated region
    $region10: #{model_head_forward.1} parent=1 // pred_check
      _
    $region11: #{model_head_forward.1} parent=1 // pred_check_branch
      %39 = sbr.rel (0) target = $region13
    $region12: #{model_head_forward.1} parent=1 // pred_region
      _
    $region13: #{model_head_forward.1} parent=1 // pred_fallthru
      _
    // Predicated region
    $region14: #{model_head_forward.1} parent=1 // pred_check
      _
    $region15: #{model_head_forward.1} parent=1 // pred_check_branch
      %41 = sbr.rel (0) target = $region17
    $region16: #{model_head_forward.1} parent=1 // pred_region
      %43 = vsyncadd [#allocation5], 0
      %s44 = sshll.u32 %s3, 4
      %s45 = int_to_ptr.hbm [resolvable:$true] %s44
      %s46 = sshll.u32 [#allocation6], 4
      %s47 = int_to_ptr.vmem [resolvable:$true] %s46
      %52 = dma.hbm_to_vmem [thread:$0]  %s45, 512, %s47, [#allocation5], 128, 128, 8
    $region17: #{model_head_forward.1} parent=1 // pred_fallthru
      _
    // Predicated region
    $region18: #{model_head_forward.1} parent=1 // pred_check
      _
    $region19: #{model_head_forward.1} parent=1 // pred_check_branch
      %54 = sbr.rel (0) target = $region21
    $region20: #{model_head_forward.1} parent=1 // pred_region
      _
    $region21: #{model_head_forward.1} parent=1 // pred_fallthru
      _
    // Predicated region
    $region22: #{model_head_forward.1} parent=1 // pred_check
      _
    $region23: #{model_head_forward.1} parent=1 // pred_check_branch
      %56 = sbr.rel (0) target = $region25
    $region24: #{model_head_forward.1} parent=1 // pred_region
      %58 = dma.done [#allocation3], 256
    $region25: #{model_head_forward.1} parent=1 // pred_fallthru
      _
    // Predicated region
    $region26: #{model_head_forward.1} parent=1 // pred_check
      _
    $region27: #{model_head_forward.1} parent=1 // pred_check_branch
      %60 = sbr.rel (0) target = $region29
    $region28: #{model_head_forward.1} parent=1 // pred_region
      %62 = dma.done [#allocation5], 512
    $region29: #{model_head_forward.1} parent=1 // pred_fallthru
      _
    // Predicated region
    $region30: #{model_head_forward.1} parent=1 // pred_check
      _
    $region31: #{model_head_forward.1} parent=1 // pred_check_branch
      %64 = sbr.rel (0) target = $region33
    $region32: #{model_head_forward.1} parent=1 // pred_region
      %66 = dma.done [#allocation5], 512
    $region33: #{model_head_forward.1} parent=1 // pred_fallthru
      _
    %v67 = vld [vmem:[#allocation2] sm:$0xff]
    %v68 = vld [vmem:[#allocation2 + $0x8] sm:$0xff]
    %v69 = vld [vmem:[#allocation4] sm:$0xff]
    %v70 = vld [vmem:[#allocation4 + $0x8] sm:$0xff]
    %v71 = vld [vmem:[#allocation4 + $0x10] sm:$0xff]
    %v72 = vld [vmem:[#allocation4 + $0x18] sm:$0xff]
    %v73 = vld [vmem:[%s2] sm:$0x1]
    %v75 = vperm.slane %v73, 0
    %vm77 = vcmask 261120
    %v79 = vsel %vm77, %v67, 0
    %v82 = vsel %vm77, %v68, 0
    %84 = vmatpush.msra.mxu0 0.0
    %85 = vmatpush.msra.mxu0 0.0
    %86 = vmatpush.msra.mxu0 0.0
    %87 = vmatpush.msra.mxu0 0.0
    %88 = vmatpush.msra.mxu0 0.0
    %89 = vmatpush.msra.mxu0 0.0
    %90 = vmatpush.msra.mxu0 0.0
    %91 = vmatpush.msra.mxu0 0.0
    %92 = vmatpush.msra.mxu0 0.0
    %93 = vmatpush.msra.mxu0 0.0
    %94 = vmatpush.msra.mxu0 0.0
    %95 = vmatpush.msra.mxu0 0.0
    %96 = vmatpush.msra.mxu0 %v72
    %97 = vmatpush.msra.mxu0 %v71
    %98 = vmatpush.msra.mxu0 %v70
    %99 = vmatpush.msra.mxu0 %v69
    %100 = vmatmul.f32.gmra.mxu0 %v79
    %v101 = vpop.f32.mrf.mxu0
    %v102 = vadd.f32 %v75, %v101
    %103 = vmatmul.f32.gmra.mxu0 %v82
    %v104 = vpop.f32.mrf.mxu0
    %v105 = vadd.f32 %v75, %v104
    %106 = vdwg.mxu0
    %v107 = vtanh.pop %v102
    %v108 = vtanh.pop %v105
    %v109 = vld [vmem:[#allocation6] sm:$0xff]
    %v110 = vld [vmem:[#allocation6 + $0x8] sm:$0xff]
    %v111 = vld [vmem:[#allocation6 + $0x10] sm:$0xff]
    %v112 = vld [vmem:[#allocation6 + $0x18] sm:$0xff]
    %v113 = vld [vmem:[%s4] sm:$0x1]
    %v115 = vperm.slane %v113, 0
    %v118 = vsel %vm77, %v107, 0
    %v121 = vsel %vm77, %v108, 0
    %123 = vmatpush.msra.mxu0 0.0
    %124 = vmatpush.msra.mxu0 0.0
    %125 = vmatpush.msra.mxu0 0.0
    %126 = vmatpush.msra.mxu0 0.0
    %127 = vmatpush.msra.mxu0 0.0
    %128 = vmatpush.msra.mxu0 0.0
    %129 = vmatpush.msra.mxu0 0.0
    %130 = vmatpush.msra.mxu0 0.0
    %131 = vmatpush.msra.mxu0 0.0
    %132 = vmatpush.msra.mxu0 0.0
    %133 = vmatpush.msra.mxu0 0.0
    %134 = vmatpush.msra.mxu0 0.0
    %135 = vmatpush.msra.mxu0 %v112
    %136 = vmatpush.msra.mxu0 %v111
    %137 = vmatpush.msra.mxu0 %v110
    %138 = vmatpush.msra.mxu0 %v109
    %139 = vmatmul.f32.gmra.mxu0 %v118
    %v140 = vpop.f32.mrf.mxu0
    %v141 = vadd.f32 %v115, %v140
    %142 = vmatmul.f32.gmra.mxu0 %v121
    %v143 = vpop.f32.mrf.mxu0
    %v144 = vadd.f32 %v115, %v143
    %145 = vdwg.mxu0
    %146 = vst [vmem:[%s5] sm:$0xff] %v141
    %147 = vst [vmem:[%s5 + $0x8] sm:$0xff] %v144
    // Predicated region
    $region34: #{model_head_forward.1} parent=1 // pred_check
      _
    $region35: #{model_head_forward.1} parent=1 // pred_check_branch
      %149 = sbr.rel (0) target = $region37
    $region36: #{model_head_forward.1} parent=1 // pred_region
      _
    $region37: #{model_head_forward.1} parent=1 // pred_fallthru
      _
    // Predicated region
    $region38: #{model_head_forward.1} parent=1 // pred_check
      _
    $region39: #{model_head_forward.1} parent=1 // pred_check_branch
      %151 = sbr.rel (0) target = $region41
    $region40: #{model_head_forward.1} parent=1 // pred_region
      _
    $region41: #{model_head_forward.1} parent=1 // pred_fallthru
      _
    %152 = vsyncpa [#allocation3], 1
    %153 = vsyncpa [#allocation5], 1

</llo_original>
